<compile_context>
chip_gen: v7x
topology: tpu7x:2x2x1
jax: 0.10.0
libtpu: 0.0.40
codegen_flags: <defaults>
</compile_context>

<pallas_src>
import functools

import jax
import jax.numpy as jnp
from jax.experimental import pallas as pl
from jax.experimental.pallas import tpu as pltpu

_TILE_CAP = 1024     # max batch rows per grid step
_TILE_QUANT = 256    # multi-step tiles rounded up to this many rows


def _round_up(x, m):
    return ((x + m - 1) // m) * m


def _select_tile(batch, tile_cap):
    """Single step for small batches; otherwise >=2 steps of 256-quantized rows."""
    if batch <= _TILE_QUANT:
        return batch
    return min(tile_cap, _round_up(pl.cdiv(batch, 2), _TILE_QUANT))


# ----------------------------- Pallas kernels ------------------------------ #
def _q_values(x_ref, w1_ref, w2_ref, w3_ref, b_ref):
    """Fused relu(relu(x@W1+b1)@W2+b2)@W3+b3; f32 MXU accumulation, f32 VPU epilogue."""
    n_feat = w1_ref.shape[-1]
    n_out = w3_ref.shape[-1]
    b1 = b_ref[0:1, 0:n_feat]          # static ref-view slices: no runtime cost
    b2 = b_ref[1:2, 0:n_feat]
    b3 = b_ref[2:3, 0:n_out]
    x = x_ref[...]
    h1 = jnp.dot(x, w1_ref[...], preferred_element_type=jnp.float32)
    h1 = jnp.maximum(h1 + b1, 0.0)
    h2 = jnp.dot(h1, w2_ref[...], preferred_element_type=jnp.float32)
    h2 = jnp.maximum(h2 + b2, 0.0)
    return jnp.dot(h2, w3_ref[...], preferred_element_type=jnp.float32) + b3


def _mlp_kernel(x_ref, w1_ref, w2_ref, w3_ref, b_ref, q_ref):
    q_ref[...] = _q_values(x_ref, w1_ref, w2_ref, w3_ref, b_ref).astype(q_ref.dtype)


def _mlp_gather_kernel(x_ref, a_ref, w1_ref, w2_ref, w3_ref, b_ref, qa_ref):
    """Same MLP plus fused action gather: outputs (tile_b, 1) selected Q-values."""
    q = _q_values(x_ref, w1_ref, w2_ref, w3_ref, b_ref)           # (tile_b, n_out)
    cols = jax.lax.broadcasted_iota(jnp.int32, q.shape, 1)
    onehot = (cols == a_ref[...]).astype(q.dtype)                  # (tile_b, n_out)
    qa_ref[...] = jnp.sum(q * onehot, axis=1, keepdims=True).astype(qa_ref.dtype)


# ------------------------------- wrappers ----------------------------------- #
def _weight_specs(w1, w2, w3, b):
    # Resident across all grid steps (constant index_map).
    return [
        pl.BlockSpec(w1.shape, lambda i: (0, 0)),
        pl.BlockSpec(w2.shape, lambda i: (0, 0)),
        pl.BlockSpec(w3.shape, lambda i: (0, 0)),
        pl.BlockSpec(b.shape, lambda i: (0, 0)),
    ]


def _cost(batch, n_in, n_feat, n_out, out_cols, arrays):
    nbytes = lambda a: int(a.size) * jnp.dtype(a.dtype).itemsize
    flops = 2 * batch * (n_in * n_feat + n_feat * n_feat + n_feat * n_out)
    bytes_accessed = sum(nbytes(a) for a in arrays) + batch * out_cols * 4
    return pl.CostEstimate(flops=flops, transcendentals=0,
                           bytes_accessed=bytes_accessed)


@functools.partial(jax.jit, static_argnames=("tile_cap",))
def mlp_forward(x, w1, w2, w3, b, *, tile_cap=_TILE_CAP):
    """x: (B, n_in) f32. Returns full Q-matrix (B, n_out) f32."""
    batch, n_in = x.shape
    n_feat = w1.shape[1]
    n_out = w3.shape[1]
    x = x.astype(w1.dtype)

    tile_b = _select_tile(batch, tile_cap)
    grid = (pl.cdiv(batch, tile_b),)   # ragged last block handled by Pallas masking

    return pl.pallas_call(
        _mlp_kernel,
        out_shape=jax.ShapeDtypeStruct((batch, n_out), jnp.float32),
        grid_spec=pltpu.PrefetchScalarGridSpec(
            num_scalar_prefetch=0,
            grid=grid,
            in_specs=[pl.BlockSpec((tile_b, n_in), lambda i: (i, 0))]
            + _weight_specs(w1, w2, w3, b),
            out_specs=pl.BlockSpec((tile_b, n_out), lambda i: (i, 0)),
        ),
        compiler_params=pltpu.CompilerParams(
            dimension_semantics=(pltpu.PARALLEL,),
        ),
        cost_estimate=_cost(batch, n_in, n_feat, n_out, n_out, (x, w1, w2, w3, b)),
    )(x, w1, w2, w3, b)


@functools.partial(jax.jit, static_argnames=("tile_cap",))
def mlp_forward_gather(x, action, w1, w2, w3, b, *, tile_cap=_TILE_CAP):
    """x: (B, n_in) f32, action: (B, 1) int32. Returns gathered Q-values (B, 1) f32."""
    batch, n_in = x.shape
    n_feat = w1.shape[1]
    n_out = w3.shape[1]
    x = x.astype(w1.dtype)

    tile_b = _select_tile(batch, tile_cap)
    grid = (pl.cdiv(batch, tile_b),)

    return pl.pallas_call(
        _mlp_gather_kernel,
        out_shape=jax.ShapeDtypeStruct((batch, 1), jnp.float32),
        grid_spec=pltpu.PrefetchScalarGridSpec(
            num_scalar_prefetch=0,
            grid=grid,
            in_specs=[
                pl.BlockSpec((tile_b, n_in), lambda i: (i, 0)),
                pl.BlockSpec((tile_b, 1), lambda i: (i, 0)),
            ]
            + _weight_specs(w1, w2, w3, b),
            out_specs=pl.BlockSpec((tile_b, 1), lambda i: (i, 0)),
        ),
        compiler_params=pltpu.CompilerParams(
            dimension_semantics=(pltpu.PARALLEL,),
        ),
        cost_estimate=_cost(batch, n_in, n_feat, n_out, 1,
                            (x, action, w1, w2, w3, b)),
    )(x, action, w1, w2, w3, b)


# ----------------------- parameter init (deterministic) -------------------- #
def _xavier_uniform(key, fan_in, fan_out, gain):
    limit = gain * jnp.sqrt(6.0 / (fan_in + fan_out))
    # stored as (in, out) so the kernel does x @ W (== torch x @ W.T)
    return jax.random.uniform(key, (fan_in, fan_out), jnp.float32, -limit, limit)


def _linear_bias(key, fan_in, fan_out):
    # PyTorch nn.Linear default bias init: U(-1/sqrt(fan_in), 1/sqrt(fan_in))
    bound = 1.0 / jnp.sqrt(fan_in)
    return jax.random.uniform(key, (1, fan_out), jnp.float32, -bound, bound)


def init_network_params(key, n_input, n_features, n_output):
    k = jax.random.split(key, 6)
    relu_gain = jnp.sqrt(2.0)   # nn.init.calculate_gain('relu')
    lin_gain = 1.0              # nn.init.calculate_gain('linear')
    w1 = _xavier_uniform(k[0], n_input, n_features, relu_gain)
    b1 = _linear_bias(k[1], n_input, n_features)
    w2 = _xavier_uniform(k[2], n_features, n_features, relu_gain)
    b2 = _linear_bias(k[3], n_features, n_features)
    w3 = _xavier_uniform(k[4], n_features, n_output, lin_gain)
    b3 = _linear_bias(k[5], n_features, n_output)
    return w1, b1, w2, b2, w3, b3


def pack_params(params):
    """One-time packing: biases stacked into a single (3, max(n_feat, n_out)) f32
    buffer; all weights kept f32 (MXU work is negligible at these sizes)."""
    w1, b1, w2, b2, w3, b3 = params
    n_feat = w1.shape[1]
    n_out = w3.shape[1]
    n_bias = max(n_feat, n_out)
    b = jnp.zeros((3, n_bias), jnp.float32)
    b = b.at[0, :n_feat].set(b1.reshape(-1))
    b = b.at[1, :n_feat].set(b2.reshape(-1))
    b = b.at[2, :n_out].set(b3.reshape(-1))
    return (w1.astype(jnp.float32), w2.astype(jnp.float32),
            w3.astype(jnp.float32), b)


# ------------------------------ module wrapper ----------------------------- #
def network_forward(weights, state, action=None):
    """Mirrors Network.forward.

    weights: output of pack_params (w1, w2, w3, packed_biases).
    state:   (B, 1, n_input) or (B, n_input)
    action:  optional (B, 1) int — gather is fused into the kernel epilogue,
             so only (B, 1) selected Q-values ever hit HBM on this path.
    """
    w1, w2, w3, b = weights
    x = jnp.squeeze(state, axis=1) if state.ndim == 3 else state
    x = x.astype(jnp.float32)
    if action is None:
        return mlp_forward(x, w1, w2, w3, b)
    action = action.astype(jnp.int32).reshape(x.shape[0], 1)
    qa = mlp_forward_gather(x, action, w1, w2, w3, b)
    # Full squeeze matches torch's .squeeze() (collapses to a scalar when B==1).
    return jnp.squeeze(qa)


# --------------------------------- main ------------------------------------ #
if __name__ == "__main__":
    key = jax.random.PRNGKey(0)

    # Acrobot-like sizes: 6-d state, 3 discrete actions, 32 hidden features.
    B, n_input, n_features, n_output = 8, 6, 32, 3

    k_param, k_state, k_act = jax.random.split(key, 3)
    params = init_network_params(k_param, n_input, n_features, n_output)
    weights = pack_params(params)

    state = jax.random.normal(k_state, (B, 1, n_input), jnp.float32)
    action = jax.random.randint(k_act, (B, 1), 0, n_output)

    # Plain-JAX reference of the hot path.
    w1, b1, w2, b2, w3, b3 = params

    def ref_fwd(xx):
        h1 = jnp.maximum(xx @ w1 + b1, 0.0)
        h2 = jnp.maximum(h1 @ w2 + b2, 0.0)
        return h2 @ w3 + b3

    # Tolerance accommodates possible bf16-pass decomposition of f32 matmuls on
    # the MXU (and in the XLA reference) at default precision; values are O(1).
    TOL = dict(atol=3e-2, rtol=3e-2)

    # 1) Q-matrix path (single grid step).
    x = jnp.squeeze(state, 1)
    q = jax.block_until_ready(network_forward(weights, state))
    assert q.shape == (B, n_output)
    assert jnp.allclose(q, ref_fwd(x), **TOL)

    # 2) Fused-gather training path: must match the kernel's own Q-matrix exactly.
    q_acted = jax.block_until_ready(network_forward(weights, state, action))
    assert q_acted.shape == (B,)
    assert jnp.allclose(q_acted, jnp.take_along_axis(q, action, axis=1)[:, 0],
                        atol=1e-5, rtol=1e-5)
    assert jnp.allclose(q_acted, jnp.take_along_axis(ref_fwd(x), action, axis=1)[:, 0],
                        **TOL)

    # 3) Large batch: 2 x 1024-row grid steps (megacore-friendly, no wrapper pad).
    B_big = 2048
    x_big = jax.random.normal(jax.random.PRNGKey(1), (B_big, n_input), jnp.float32)
    q_big = jax.block_until_ready(network_forward(weights, x_big))
    assert q_big.shape == (B_big, n_output)
    assert jnp.allclose(q_big, ref_fwd(x_big), **TOL)

    # 4) Ragged batch: tile_b=512, grid=2, last block only 88 valid rows —
    #    exercises Pallas boundary masking instead of wrapper-side padding.
    B_rag = 600
    x_rag = jax.random.normal(jax.random.PRNGKey(2), (B_rag, n_input), jnp.float32)
    a_rag = jax.random.randint(jax.random.PRNGKey(3), (B_rag, 1), 0, n_output)
    q_rag = jax.block_until_ready(network_forward(weights, x_rag))
    qa_rag = jax.block_until_ready(network_forward(weights, x_rag, a_rag))
    assert q_rag.shape == (B_rag, n_output)
    assert qa_rag.shape == (B_rag,)
    assert jnp.allclose(q_rag, ref_fwd(x_rag), **TOL)
    assert jnp.allclose(qa_rag, jnp.take_along_axis(q_rag, a_rag, axis=1)[:, 0],
                        atol=1e-5, rtol=1e-5)

    print("KERNEL_OK")
</pallas_src>

<mosaic_0001>
module attributes {stable_mosaic.version = 11 : i64} {
  func.func @_mlp_kernel(%arg0: i32, %arg1: memref<8x6xf32, #tpu.memory_space<vmem>>, %arg2: memref<6x32xf32, #tpu.memory_space<vmem>>, %arg3: memref<32x32xf32, #tpu.memory_space<vmem>>, %arg4: memref<32x3xf32, #tpu.memory_space<vmem>>, %arg5: memref<3x32xf32, #tpu.memory_space<vmem>>, %arg6: memref<8x3xf32, #tpu.memory_space<vmem>>) attributes {dimension_semantics = [#tpu.dimension_semantics<parallel>], iteration_bounds = array<i64: 1>, scalar_prefetch = 0 : i64, scratch_operands = 0 : i64, tpu.core_type = #tpu.core_type<tc>, window_params = [{transform_indices = @transform_0, window_bounds = array<i64: 8, 6>}, {pipeline_mode = #tpu.pipeline_mode<synchronous>, transform_indices = @transform_1, window_bounds = array<i64: 6, 32>}, {pipeline_mode = #tpu.pipeline_mode<synchronous>, transform_indices = @transform_2, window_bounds = array<i64: 32, 32>}, {pipeline_mode = #tpu.pipeline_mode<synchronous>, transform_indices = @transform_3, window_bounds = array<i64: 32, 3>}, {pipeline_mode = #tpu.pipeline_mode<synchronous>, transform_indices = @transform_4, window_bounds = array<i64: 3, 32>}, {transform_indices = @transform_5, window_bounds = array<i64: 8, 3>}]} {
    %c0 = arith.constant 0 : index
    %c0_0 = arith.constant 0 : index
    %0 = vector.load %arg5[%c0, %c0_0] : memref<3x32xf32, #tpu.memory_space<vmem>>, vector<1x32xf32>
    %c1 = arith.constant 1 : index
    %c0_1 = arith.constant 0 : index
    %1 = vector.load %arg5[%c1, %c0_1] : memref<3x32xf32, #tpu.memory_space<vmem>>, vector<1x32xf32>
    %c2 = arith.constant 2 : index
    %c0_2 = arith.constant 0 : index
    %2 = vector.load %arg5[%c2, %c0_2] : memref<3x32xf32, #tpu.memory_space<vmem>>, vector<1x3xf32>
    %c0_3 = arith.constant 0 : index
    %c0_4 = arith.constant 0 : index
    %3 = vector.load %arg1[%c0_3, %c0_4] : memref<8x6xf32, #tpu.memory_space<vmem>>, vector<8x6xf32>
    %c0_5 = arith.constant 0 : index
    %c0_6 = arith.constant 0 : index
    %4 = vector.load %arg2[%c0_5, %c0_6] : memref<6x32xf32, #tpu.memory_space<vmem>>, vector<6x32xf32>
    %cst = arith.constant dense<0.000000e+00> : vector<8x32xf32>
    %5 = tpu.matmul %3, %4, %cst {dimension_numbers = #tpu.dot_dimension_numbers<[1], [0], [0], [1], [0, 0, 1, 1], [], []>} : vector<8x6xf32>, vector<6x32xf32>, vector<8x32xf32> -> vector<8x32xf32>
    %6 = vector.broadcast %0 : vector<1x32xf32> to vector<8x32xf32>
    %7 = arith.addf %5, %6 : vector<8x32xf32>
    %cst_7 = arith.constant 0.000000e+00 : f32
    %8 = vector.broadcast %cst_7 : f32 to vector<8x32xf32>
    %9 = arith.maximumf %7, %8 : vector<8x32xf32>
    %c0_8 = arith.constant 0 : index
    %c0_9 = arith.constant 0 : index
    %10 = vector.load %arg3[%c0_8, %c0_9] : memref<32x32xf32, #tpu.memory_space<vmem>>, vector<32x32xf32>
    %cst_10 = arith.constant dense<0.000000e+00> : vector<8x32xf32>
    %11 = tpu.matmul %9, %10, %cst_10 {dimension_numbers = #tpu.dot_dimension_numbers<[1], [0], [0], [1], [0, 0, 1, 1], [], []>} : vector<8x32xf32>, vector<32x32xf32>, vector<8x32xf32> -> vector<8x32xf32>
    %12 = vector.broadcast %1 : vector<1x32xf32> to vector<8x32xf32>
    %13 = arith.addf %11, %12 : vector<8x32xf32>
    %cst_11 = arith.constant 0.000000e+00 : f32
    %14 = vector.broadcast %cst_11 : f32 to vector<8x32xf32>
    %15 = arith.maximumf %13, %14 : vector<8x32xf32>
    %c0_12 = arith.constant 0 : index
    %c0_13 = arith.constant 0 : index
    %16 = vector.load %arg4[%c0_12, %c0_13] : memref<32x3xf32, #tpu.memory_space<vmem>>, vector<32x3xf32>
    %cst_14 = arith.constant dense<0.000000e+00> : vector<8x3xf32>
    %17 = tpu.matmul %15, %16, %cst_14 {dimension_numbers = #tpu.dot_dimension_numbers<[1], [0], [0], [1], [0, 0, 1, 1], [], []>} : vector<8x32xf32>, vector<32x3xf32>, vector<8x3xf32> -> vector<8x3xf32>
    %18 = vector.broadcast %2 : vector<1x3xf32> to vector<8x3xf32>
    %19 = arith.addf %17, %18 : vector<8x3xf32>
    %c0_15 = arith.constant 0 : index
    %c0_16 = arith.constant 0 : index
    %20 = vector.load %arg6[%c0_15, %c0_16] : memref<8x3xf32, #tpu.memory_space<vmem>>, vector<8x3xf32>
    tpu.vector_store %arg6[%c0_15, %c0_16], %19 {strides = array<i32>} : memref<8x3xf32, #tpu.memory_space<vmem>>, vector<8x3xf32>,
    return
  }
  func.func @transform_0(%arg0: i32) -> (i32, i32) {
    %c0_i32 = arith.constant 0 : i32
    %c0_i32_0 = arith.constant 0 : i32
    return %arg0, %c0_i32 : i32, i32
  }
  func.func @transform_1(%arg0: i32) -> (i32, i32) {
    %c0_i32 = arith.constant 0 : i32
    %c0_i32_0 = arith.constant 0 : i32
    %c0_i32_1 = arith.constant 0 : i32
    return %c0_i32, %c0_i32_0 : i32, i32
  }
  func.func @transform_2(%arg0: i32) -> (i32, i32) {
    %c0_i32 = arith.constant 0 : i32
    %c0_i32_0 = arith.constant 0 : i32
    %c0_i32_1 = arith.constant 0 : i32
    return %c0_i32, %c0_i32_0 : i32, i32
  }
  func.func @transform_3(%arg0: i32) -> (i32, i32) {
    %c0_i32 = arith.constant 0 : i32
    %c0_i32_0 = arith.constant 0 : i32
    %c0_i32_1 = arith.constant 0 : i32
    return %c0_i32, %c0_i32_0 : i32, i32
  }
  func.func @transform_4(%arg0: i32) -> (i32, i32) {
    %c0_i32 = arith.constant 0 : i32
    %c0_i32_0 = arith.constant 0 : i32
    %c0_i32_1 = arith.constant 0 : i32
    return %c0_i32, %c0_i32_0 : i32, i32
  }
  func.func @transform_5(%arg0: i32) -> (i32, i32) {
    %c0_i32 = arith.constant 0 : i32
    %c0_i32_0 = arith.constant 0 : i32
    return %arg0, %c0_i32 : i32, i32
  }
}

</mosaic_0001>

<llo_original>
// kernel: mlp_forward.1
$region0: #{mlp_forward.1}
  #allocation0 [shape = 'u32[]', space=smem, size = 0x4, offset = 0x4, fixed_abs, tag = 'smem constant byte address 0x4 - core index']
  #allocation1 [shape = 'u32[144,128]{1,0:T(1,128)}', space=vmem, size = 0x12000, scoped, tag = 'internal scratch']
  %s0 = inlined_call_operand.vmem [shape: f32[8,6], index: 0, kind: input, shape index: {}]
  %s1 = inlined_call_operand.hbm [shape: f32[6,32], index: 1, kind: input, shape index: {}]
  %s2 = inlined_call_operand.vmem [shape: f32[32,32], index: 2, kind: input, shape index: {}]
  %s3 = inlined_call_operand.vmem [shape: f32[32,3], index: 3, kind: input, shape index: {}]
  %s4 = inlined_call_operand.vmem [shape: f32[3,32], index: 4, kind: input, shape index: {}]
  %s5 = inlined_call_operand.vmem [shape: f32[8,3], index: 5, kind: output, shape index: {}]
  %s6 = sld [smem:[#allocation0]]
  $region34: #{mlp_forward.1} parent=0
    _
  %s8 = ssub.s32 1, %s6
  %s9 = scalar_select 0, %s8, %s6
  $region1: #{mlp_forward.1} parent=0
    #allocation2 [shape = 'u8[4096]{0}', space=vmem, size = 0x1000, scoped, tag = 'input window, operand 1, single buffered']
    #allocation3 [shape = 's32[1]{0}', space=sflag, size = 0x4, scoped, tag = 'scoped memory for mlp_forward.1']
    %10 = vsyncpa [#allocation3], 0
    // Predicated region
    $region2: #{mlp_forward.1} parent=1 // pred_check
      _
    $region3: #{mlp_forward.1} parent=1 // pred_check_branch
      %12 = sbr.rel (0) target = $region5
    $region4: #{mlp_forward.1} parent=1 // pred_region
      _
    $region5: #{mlp_forward.1} parent=1 // pred_fallthru
      _
    // Predicated region
    $region6: #{mlp_forward.1} parent=1 // pred_check
      _
    $region7: #{mlp_forward.1} parent=1 // pred_check_branch
      %14 = sbr.rel (0) target = $region9
    $region8: #{mlp_forward.1} parent=1 // pred_region
      %s16 = ssub.s32 128, 128
      %17 = vsyncadd [#allocation3], %s16
      %s19 = sshll.u32 [#allocation2], 4
      %s20 = int_to_ptr.vmem [resolvable:$true] %s19
      %22 = dma.hbm_to_vmem [thread:$0]  %s1, 128, %s20, [#allocation3]
    $region9: #{mlp_forward.1} parent=1 // pred_fallthru
      _
    // Predicated region
    $region10: #{mlp_forward.1} parent=1 // pred_check
      _
    $region11: #{mlp_forward.1} parent=1 // pred_check_branch
      %24 = sbr.rel (0) target = $region13
    $region12: #{mlp_forward.1} parent=1 // pred_region
      _
    $region13: #{mlp_forward.1} parent=1 // pred_fallthru
      _
    // Predicated region
    $region14: #{mlp_forward.1} parent=1 // pred_check
      _
    $region15: #{mlp_forward.1} parent=1 // pred_check_branch
      %26 = sbr.rel (0) target = $region17
    $region16: #{mlp_forward.1} parent=1 // pred_region
      _
    $region17: #{mlp_forward.1} parent=1 // pred_fallthru
      _
    // Predicated region
    $region18: #{mlp_forward.1} parent=1 // pred_check
      _
    $region19: #{mlp_forward.1} parent=1 // pred_check_branch
      %28 = sbr.rel (0) target = $region21
    $region20: #{mlp_forward.1} parent=1 // pred_region
      _
    $region21: #{mlp_forward.1} parent=1 // pred_fallthru
      _
    // Predicated region
    $region22: #{mlp_forward.1} parent=1 // pred_check
      _
    $region23: #{mlp_forward.1} parent=1 // pred_check_branch
      %30 = sbr.rel (0) target = $region25
    $region24: #{mlp_forward.1} parent=1 // pred_region
      %31 = dma.done [#allocation3], 128
    $region25: #{mlp_forward.1} parent=1 // pred_fallthru
      _
    %v32 = vld [vmem:[%s4] sm:$0x1]
    %v33 = vld [vmem:[%s4 + $0x1] sm:$0x1]
    %v34 = vld [vmem:[%s4 + $0x2] sm:$0x1]
    %v35 = vld [vmem:[%s0] sm:$0xff]
    %v36 = vld [vmem:[#allocation2] sm:$0x3f]
    %v37 = vlaneseq
    %v38 = vshrl.u32 %v37, 7
    %v39 = vsub.s32 0, %v38
    %v40 = vrot.slane %v32, %v39
    %vm41 = vcmask 48128
    %v43 = vsel %vm41, %v35, 0
    %vm45 = vcmask 1045504
    %v47 = vsel %vm45, %v36, 0
    %49 = vmatprep.subr.mxu0 0.0
    %50 = vmatpush1.msra.mxu0 %v47
    %51 = vmatprep.subr.mxu0 0.0
    %52 = vmatpush1.msra.mxu0 0.0
    %53 = vmatprep.subr.mxu0 0.0
    %54 = vmatpush1.msra.mxu0 0.0
    %55 = vmatprep.subr.mxu0 0.0
    %56 = vmatpush1.msra.mxu0 0.0
    %57 = vmatprep.subr.mxu0 0.0
    %58 = vmatpush1.msra.mxu0 0.0
    %59 = vmatprep.subr.mxu0 0.0
    %60 = vmatpush1.msra.mxu0 0.0
    %61 = vmatprep.subr.mxu0 0.0
    %62 = vmatpush1.msra.mxu0 0.0
    %63 = vmatprep.subr.mxu0 0.0
    %64 = vmatpush1.msra.mxu0 0.0
    %65 = vmatprep.subr.mxu0 0.0
    %66 = vmatpush1.msra.mxu0 0.0
    %67 = vmatprep.subr.mxu0 0.0
    %68 = vmatpush1.msra.mxu0 0.0
    %69 = vmatprep.subr.mxu0 0.0
    %70 = vmatpush1.msra.mxu0 0.0
    %71 = vmatprep.subr.mxu0 0.0
    %72 = vmatpush1.msra.mxu0 0.0
    %73 = vmatprep.subr.mxu0 0.0
    %74 = vmatpush1.msra.mxu0 0.0
    %75 = vmatprep.subr.mxu0 0.0
    %76 = vmatpush1.msra.mxu0 0.0
    %77 = vmatprep.subr.mxu0 0.0
    %78 = vmatpush1.msra.mxu0 0.0
    %79 = vmatprep.subr.mxu0 0.0
    %80 = vmatpush1.msra.mxu0 0.0
    %81 = vmatprep.subr.mxu0 0.0
    %82 = vmatpush1.msra.mxu0 0.0
    %83 = vmatprep.subr.mxu0 0.0
    %84 = vmatpush1.msra.mxu0 0.0
    %85 = vmatprep.subr.mxu0 0.0
    %86 = vmatpush1.msra.mxu0 0.0
    %87 = vmatprep.subr.mxu0 0.0
    %88 = vmatpush1.msra.mxu0 0.0
    %89 = vmatprep.subr.mxu0 0.0
    %90 = vmatpush1.msra.mxu0 0.0
    %91 = vmatprep.subr.mxu0 0.0
    %92 = vmatpush1.msra.mxu0 0.0
    %93 = vmatprep.subr.mxu0 0.0
    %94 = vmatpush1.msra.mxu0 0.0
    %95 = vmatprep.subr.mxu0 0.0
    %96 = vmatpush1.msra.mxu0 0.0
    %97 = vmatprep.subr.mxu0 0.0
    %98 = vmatpush1.msra.mxu0 0.0
    %99 = vmatprep.subr.mxu0 0.0
    %100 = vmatpush1.msra.mxu0 0.0
    %101 = vmatprep.subr.mxu0 0.0
    %102 = vmatpush1.msra.mxu0 0.0
    %103 = vmatprep.subr.mxu0 0.0
    %104 = vmatpush1.msra.mxu0 0.0
    %105 = vmatprep.subr.mxu0 0.0
    %106 = vmatpush1.msra.mxu0 0.0
    %107 = vmatprep.subr.mxu0 0.0
    %108 = vmatpush1.msra.mxu0 0.0
    %109 = vmatprep.subr.mxu0 0.0
    %110 = vmatpush1.msra.mxu0 0.0
    %111 = vmatprep.subr.mxu0 0.0
    %112 = vmatpush1.msra.mxu0 0.0
    %113 = vmatprep.mubr.f32.mxu0 0.0
    %114 = vmatmul.mubr.f32.gmra.mrb[0].mxu0 %v43
    %v115 = vpop.f32.mrb[0].mxu0
    %v116 = vadd.f32 %v40, %v115
    %v117 = vpop.f32.mrb[0].mxu0
    %118 = vdwg.mxu0
    %v119 = vmax.f32 %v116, 0.0
    %v120 = vld [vmem:[%s2] sm:$0xff]
    %v121 = vld [vmem:[%s2 + $0x8] sm:$0xff]
    %v122 = vld [vmem:[%s2 + $0x10] sm:$0xff]
    %v123 = vld [vmem:[%s2 + $0x18] sm:$0xff]
    %v124 = vlaneseq
    %v125 = vshrl.u32 %v124, 7
    %v126 = vsub.s32 0, %v125
    %v127 = vrot.slane %v33, %v126
    %vm128 = vcmask 261120
    %v130 = vsel %vm128, %v119, 0
    %132 = vmatprep.subr.mxu0 0.0
    %133 = vmatpush1.msra.mxu0 %v120
    %134 = vmatprep.subr.mxu0 0.0
    %135 = vmatpush1.msra.mxu0 %v121
    %136 = vmatprep.subr.mxu0 0.0
    %137 = vmatpush1.msra.mxu0 %v122
    %138 = vmatprep.subr.mxu0 0.0
    %139 = vmatpush1.msra.mxu0 %v123
    %140 = vmatprep.subr.mxu0 0.0
    %141 = vmatpush1.msra.mxu0 0.0
    %142 = vmatprep.subr.mxu0 0.0
    %143 = vmatpush1.msra.mxu0 0.0
    %144 = vmatprep.subr.mxu0 0.0
    %145 = vmatpush1.msra.mxu0 0.0
    %146 = vmatprep.subr.mxu0 0.0
    %147 = vmatpush1.msra.mxu0 0.0
    %148 = vmatprep.subr.mxu0 0.0
    %149 = vmatpush1.msra.mxu0 0.0
    %150 = vmatprep.subr.mxu0 0.0
    %151 = vmatpush1.msra.mxu0 0.0
    %152 = vmatprep.subr.mxu0 0.0
    %153 = vmatpush1.msra.mxu0 0.0
    %154 = vmatprep.subr.mxu0 0.0
    %155 = vmatpush1.msra.mxu0 0.0
    %156 = vmatprep.subr.mxu0 0.0
    %157 = vmatpush1.msra.mxu0 0.0
    %158 = vmatprep.subr.mxu0 0.0
    %159 = vmatpush1.msra.mxu0 0.0
    %160 = vmatprep.subr.mxu0 0.0
    %161 = vmatpush1.msra.mxu0 0.0
    %162 = vmatprep.subr.mxu0 0.0
    %163 = vmatpush1.msra.mxu0 0.0
    %164 = vmatprep.subr.mxu0 0.0
    %165 = vmatpush1.msra.mxu0 0.0
    %166 = vmatprep.subr.mxu0 0.0
    %167 = vmatpush1.msra.mxu0 0.0
    %168 = vmatprep.subr.mxu0 0.0
    %169 = vmatpush1.msra.mxu0 0.0
    %170 = vmatprep.subr.mxu0 0.0
    %171 = vmatpush1.msra.mxu0 0.0
    %172 = vmatprep.subr.mxu0 0.0
    %173 = vmatpush1.msra.mxu0 0.0
    %174 = vmatprep.subr.mxu0 0.0
    %175 = vmatpush1.msra.mxu0 0.0
    %176 = vmatprep.subr.mxu0 0.0
    %177 = vmatpush1.msra.mxu0 0.0
    %178 = vmatprep.subr.mxu0 0.0
    %179 = vmatpush1.msra.mxu0 0.0
    %180 = vmatprep.subr.mxu0 0.0
    %181 = vmatpush1.msra.mxu0 0.0
    %182 = vmatprep.subr.mxu0 0.0
    %183 = vmatpush1.msra.mxu0 0.0
    %184 = vmatprep.subr.mxu0 0.0
    %185 = vmatpush1.msra.mxu0 0.0
    %186 = vmatprep.subr.mxu0 0.0
    %187 = vmatpush1.msra.mxu0 0.0
    %188 = vmatprep.subr.mxu0 0.0
    %189 = vmatpush1.msra.mxu0 0.0
    %190 = vmatprep.subr.mxu0 0.0
    %191 = vmatpush1.msra.mxu0 0.0
    %192 = vmatprep.subr.mxu0 0.0
    %193 = vmatpush1.msra.mxu0 0.0
    %194 = vmatprep.subr.mxu0 0.0
    %195 = vmatpush1.msra.mxu0 0.0
    %196 = vmatprep.mubr.f32.mxu0 0.0
    %197 = vmatmul.mubr.f32.gmra.mrb[0].mxu0 %v130
    %v198 = vpop.f32.mrb[0].mxu0
    %v199 = vadd.f32 %v127, %v198
    %v200 = vpop.f32.mrb[0].mxu0
    %201 = vdwg.mxu0
    %v202 = vmax.f32 %v199, 0.0
    %v203 = vld [vmem:[%s3] sm:$0xff]
    %v204 = vld [vmem:[%s3 + $0x8] sm:$0xff]
    %v205 = vld [vmem:[%s3 + $0x10] sm:$0xff]
    %v206 = vld [vmem:[%s3 + $0x18] sm:$0xff]
    %v207 = vlaneseq
    %v208 = vshrl.u32 %v207, 7
    %v209 = vsub.s32 0, %v208
    %v210 = vrot.slane %v34, %v209
    %v212 = vsel %vm128, %v202, 0
    %214 = vmatprep.subr.mxu0 0.0
    %215 = vmatpush1.msra.mxu0 %v203
    %216 = vmatprep.subr.mxu0 0.0
    %217 = vmatpush1.msra.mxu0 %v204
    %218 = vmatprep.subr.mxu0 0.0
    %219 = vmatpush1.msra.mxu0 %v205
    %220 = vmatprep.subr.mxu0 0.0
    %221 = vmatpush1.msra.mxu0 %v206
    %222 = vmatprep.subr.mxu0 0.0
    %223 = vmatpush1.msra.mxu0 0.0
    %224 = vmatprep.subr.mxu0 0.0
    %225 = vmatpush1.msra.mxu0 0.0
    %226 = vmatprep.subr.mxu0 0.0
    %227 = vmatpush1.msra.mxu0 0.0
    %228 = vmatprep.subr.mxu0 0.0
    %229 = vmatpush1.msra.mxu0 0.0
    %230 = vmatprep.subr.mxu0 0.0
    %231 = vmatpush1.msra.mxu0 0.0
    %232 = vmatprep.subr.mxu0 0.0
    %233 = vmatpush1.msra.mxu0 0.0
    %234 = vmatprep.subr.mxu0 0.0
    %235 = vmatpush1.msra.mxu0 0.0
    %236 = vmatprep.subr.mxu0 0.0
    %237 = vmatpush1.msra.mxu0 0.0
    %238 = vmatprep.subr.mxu0 0.0
    %239 = vmatpush1.msra.mxu0 0.0
    %240 = vmatprep.subr.mxu0 0.0
    %241 = vmatpush1.msra.mxu0 0.0
    %242 = vmatprep.subr.mxu0 0.0
    %243 = vmatpush1.msra.mxu0 0.0
    %244 = vmatprep.subr.mxu0 0.0
    %245 = vmatpush1.msra.mxu0 0.0
    %246 = vmatprep.subr.mxu0 0.0
    %247 = vmatpush1.msra.mxu0 0.0
    %248 = vmatprep.subr.mxu0 0.0
    %249 = vmatpush1.msra.mxu0 0.0
    %250 = vmatprep.subr.mxu0 0.0
    %251 = vmatpush1.msra.mxu0 0.0
    %252 = vmatprep.subr.mxu0 0.0
    %253 = vmatpush1.msra.mxu0 0.0
    %254 = vmatprep.subr.mxu0 0.0
    %255 = vmatpush1.msra.mxu0 0.0
    %256 = vmatprep.subr.mxu0 0.0
    %257 = vmatpush1.msra.mxu0 0.0
    %258 = vmatprep.subr.mxu0 0.0
    %259 = vmatpush1.msra.mxu0 0.0
    %260 = vmatprep.subr.mxu0 0.0
    %261 = vmatpush1.msra.mxu0 0.0
    %262 = vmatprep.subr.mxu0 0.0
    %263 = vmatpush1.msra.mxu0 0.0
    %264 = vmatprep.subr.mxu0 0.0
    %265 = vmatpush1.msra.mxu0 0.0
    %266 = vmatprep.subr.mxu0 0.0
    %267 = vmatpush1.msra.mxu0 0.0
    %268 = vmatprep.subr.mxu0 0.0
    %269 = vmatpush1.msra.mxu0 0.0
    %270 = vmatprep.subr.mxu0 0.0
    %271 = vmatpush1.msra.mxu0 0.0
    %272 = vmatprep.subr.mxu0 0.0
    %273 = vmatpush1.msra.mxu0 0.0
    %274 = vmatprep.subr.mxu0 0.0
    %275 = vmatpush1.msra.mxu0 0.0
    %276 = vmatprep.subr.mxu0 0.0
    %277 = vmatpush1.msra.mxu0 0.0
    %278 = vmatprep.mubr.f32.mxu0 0.0
    %279 = vmatmul.mubr.f32.gmra.mrb[0].mxu0 %v212
    %v280 = vpop.f32.mrb[0].mxu0
    %v281 = vadd.f32 %v210, %v280
    %v282 = vpop.f32.mrb[0].mxu0
    %283 = vdwg.mxu0
    %vm284 = vcmask 23552
    %285 = vst.msk [vmem:[%s5] sm:$0xff] %vm284, %v281
    // Predicated region
    $region26: #{mlp_forward.1} parent=1 // pred_check
      _
    $region27: #{mlp_forward.1} parent=1 // pred_check_branch
      %287 = sbr.rel (0) target = $region29
    $region28: #{mlp_forward.1} parent=1 // pred_region
      _
    $region29: #{mlp_forward.1} parent=1 // pred_fallthru
      _
    // Predicated region
    $region30: #{mlp_forward.1} parent=1 // pred_check
      _
    $region31: #{mlp_forward.1} parent=1 // pred_check_branch
      %289 = sbr.rel (0) target = $region33
    $region32: #{mlp_forward.1} parent=1 // pred_region
      _
    $region33: #{mlp_forward.1} parent=1 // pred_fallthru
      _
    %290 = vsyncpa [#allocation3], 1

</llo_original>
